<compile_context>
chip_gen: v7x
topology: tpu7x:2x2x1
jax: 0.10.0
libtpu: 0.0.40
codegen_flags: <defaults>
</compile_context>

<pallas_src>
import jax
import jax.numpy as jnp
from jax.experimental import pallas as pl
from jax.experimental.pallas import tpu as pltpu


# ----------------------------- kernel body ---------------------------------

def _ffn_kernel(x_ref, w1t_ref, b1_ref, w2t_ref, b2_ref, o_ref, acc_ref):
    # x_ref  : [tm, dmodel]      w1t_ref: [dmodel, tdff]    b1_ref: [1, tdff]
    # w2t_ref: [tdff, dmodel]    b2_ref : [1, dmodel]
    # o_ref  : [tm, dmodel]      acc_ref: [tm, dmodel] f32 (resident over j)
    j = pl.program_id(1)

    # fc1 slice + ReLU -> [tm, tdff] in f32.  Canonical [M,K]@[K,N] MXU matmul.
    h = jnp.dot(x_ref[...], w1t_ref[...], preferred_element_type=jnp.float32)
    h = jnp.maximum(h + b1_ref[...].astype(jnp.float32), 0.0)

    # fc2 partial product for this dff slice -> [tm, dmodel] in f32.
    part = jnp.dot(h.astype(w2t_ref.dtype), w2t_ref[...],
                   preferred_element_type=jnp.float32)

    @pl.when(j == 0)
    def _():
        acc_ref[...] = part                 # first step: direct write, no zero pass

    @pl.when(j > 0)
    def _():
        acc_ref[...] = acc_ref[...] + part

    @pl.when(j == pl.num_programs(1) - 1)
    def _():
        o_ref[...] = (acc_ref[...]
                      + b2_ref[...].astype(jnp.float32)).astype(o_ref.dtype)


# --------------------------- tile-size selection ----------------------------

def _tile_candidates(dim, multiple):
    """Divisors of `dim` that are multiples of `multiple`, plus `dim` itself
    (full-extent blocks are always layout-legal). Descending order."""
    cands = {dim}
    d = multiple
    while d < dim:
        if dim % d == 0:
            cands.add(d)
        d += multiple
    return sorted(cands, reverse=True)


def _vmem_estimate(tm, tdff, dmodel, xb, wb, ob):
    """Rough per-kernel VMEM footprint (double-buffered blocks + f32 acc)."""
    x_blk = 2 * tm * dmodel * xb
    w1_blk = 2 * dmodel * tdff * wb
    w2_blk = 2 * tdff * dmodel * wb
    b_blk = 2 * (tdff + dmodel) * wb
    out_blk = 2 * tm * dmodel * ob
    acc = tm * dmodel * 4
    return x_blk + w1_blk + w2_blk + b_blk + out_blk + acc


def _select_tiles(M, dmodel, dff, xb, wb, ob, budget, tm_cap, tdff_cap):
    tm_cands = _tile_candidates(M, 8)        # sublane dim: multiple of 8 or full
    tdff_cands = _tile_candidates(dff, 128)  # lane dim: multiple of 128 or full
    tm_min = tm_cands[-1]

    def fits(tm, tdff):
        return _vmem_estimate(tm, tdff, dmodel, xb, wb, ob) <= budget

    # tdff: prefer the weight-resident fast path (tdff == dff) when it fits,
    # else the largest 128-multiple divisor <= tdff_cap that fits.
    if fits(tm_min, dff):
        tdff = dff
    else:
        tdff = None
        for c in tdff_cands:
            if c <= tdff_cap and fits(tm_min, c):
                tdff = c
                break
        if tdff is None:
            tdff = tdff_cands[-1]            # best effort

    # tm: largest candidate <= tm_cap that fits the budget.
    tm = tm_min
    for c in tm_cands:
        if c <= tm_cap and fits(c, tdff):
            tm = c
            break

    # Prefer >= 2 row tiles so the 'parallel' axis can feed both TCs (v7x).
    if M // tm < 2:
        for c in tm_cands:
            if c < tm and M // c >= 2 and fits(c, tdff):
                tm = c
                break

    return tm, tdff


# ------------------------------- wrapper ------------------------------------

def position_wise_feed_forward(x, w1, b1, w2, b2, *, tm_cap=1024, tdff_cap=512):
    """x: [..., dmodel]; w1: [dff, dmodel]; b1: [dff]; w2: [dmodel, dff]; b2: [dmodel]."""
    orig_shape = x.shape
    dmodel = orig_shape[-1]
    dff = w1.shape[0]
    assert w1.shape == (dff, dmodel)
    assert w2.shape == (dmodel, dff)
    assert b1.shape == (dff,) and b2.shape == (dmodel,)

    x2 = x.reshape(-1, dmodel)               # [M, dmodel]
    M = x2.shape[0]

    # One-time transpose to canonical MXU weight layouts (done by XLA outside
    # the kernel; ideally params are stored in this layout).
    w1t = w1.T                               # [dmodel, dff]
    w2t = w2.T                               # [dff, dmodel]
    b1_2d = b1.reshape(1, dff)
    b2_2d = b2.reshape(1, dmodel)

    # Per-generation VMEM budget (v5e/v6e: 128 MiB, v7x: 64 MiB per TC).
    try:
        vmem_phys = int(pltpu.get_tpu_info().vmem_capacity_bytes)
    except Exception:
        vmem_phys = 64 << 20                 # conservative fallback
    budget = int(vmem_phys * 0.70)           # tile-sizing budget (headroom for Mosaic)
    vmem_limit = int(vmem_phys * 0.80)       # scoped limit handed to the compiler

    xb = jnp.dtype(x.dtype).itemsize
    wb = jnp.dtype(w1.dtype).itemsize
    ob = xb

    tm, tdff = _select_tiles(M, dmodel, dff, xb, wb, ob, budget, tm_cap, tdff_cap)
    grid = (M // tm, dff // tdff)

    out = pl.pallas_call(
        _ffn_kernel,
        out_shape=jax.ShapeDtypeStruct((M, dmodel), x.dtype),
        grid=grid,
        in_specs=[
            pl.BlockSpec((tm, dmodel), lambda i, j: (i, 0)),      # x rows
            pl.BlockSpec((dmodel, tdff), lambda i, j: (0, j)),    # W1^T dff-slice
            pl.BlockSpec((1, tdff), lambda i, j: (0, j)),         # b1 dff-slice
            pl.BlockSpec((tdff, dmodel), lambda i, j: (j, 0)),    # W2^T dff-slice
            pl.BlockSpec((1, dmodel), lambda i, j: (0, 0)),       # b2
        ],
        out_specs=pl.BlockSpec((tm, dmodel), lambda i, j: (i, 0)),  # lane-dense out
        scratch_shapes=[pltpu.VMEM((tm, dmodel), jnp.float32)],
        compiler_params=pltpu.CompilerParams(
            dimension_semantics=("parallel", "arbitrary"),
            vmem_limit_bytes=vmem_limit,
        ),
    )(x2, w1t, b1_2d, w2t, b2_2d)

    return out.reshape(orig_shape)


# ------------------------------- reference ----------------------------------

def _reference(x, w1, b1, w2, b2):
    h = jnp.maximum(jnp.matmul(x, w1.T) + b1, 0.0)
    return jnp.matmul(h, w2.T) + b2


# --------------------------------- main --------------------------------------

if __name__ == "__main__":
    key = jax.random.PRNGKey(0)

    def make_inputs(key, batch, seq, dmodel, dff):
        kx, kw1, kb1, kw2, kb2 = jax.random.split(key, 5)
        x = jax.random.normal(kx, (batch, seq, dmodel), dtype=jnp.float32)
        w1 = jax.random.normal(kw1, (dff, dmodel), dtype=jnp.float32) / jnp.sqrt(dmodel)
        b1 = jax.random.normal(kb1, (dff,), dtype=jnp.float32)
        w2 = jax.random.normal(kw2, (dmodel, dff), dtype=jnp.float32) / jnp.sqrt(dff)
        b2 = jax.random.normal(kb2, (dmodel,), dtype=jnp.float32)
        return x, w1, b1, w2, b2

    # Case 1: scaled-down dmodel/dff, lane-aligned, 2 row tiles (megacore path).
    k1, k2 = jax.random.split(key)
    x, w1, b1, w2, b2 = make_inputs(k1, batch=2, seq=8, dmodel=128, dff=256)
    out = jax.block_until_ready(position_wise_feed_forward(x, w1, b1, w2, b2))
    ref = _reference(x, w1, b1, w2, b2)
    assert out.shape == x.shape
    assert jnp.allclose(out, ref, atol=1e-3, rtol=1e-3), "case 1 mismatch vs reference"

    # Case 2: M not a multiple of 8 -> full-extent row block fallback.
    x, w1, b1, w2, b2 = make_inputs(k2, batch=1, seq=10, dmodel=128, dff=384)
    out = jax.block_until_ready(position_wise_feed_forward(x, w1, b1, w2, b2))
    ref = _reference(x, w1, b1, w2, b2)
    assert out.shape == x.shape
    assert jnp.allclose(out, ref, atol=1e-3, rtol=1e-3), "case 2 mismatch vs reference"

    print("KERNEL_OK")
</pallas_src>

<mosaic_0001>
module attributes {stable_mosaic.version = 11 : i64} {
  func.func @_ffn_kernel(%arg0: i32, %arg1: i32, %arg2: memref<8x128xf32, #tpu.memory_space<vmem>>, %arg3: memref<128x256xf32, #tpu.memory_space<vmem>>, %arg4: memref<1x256xf32, #tpu.memory_space<vmem>>, %arg5: memref<256x128xf32, #tpu.memory_space<vmem>>, %arg6: memref<1x128xf32, #tpu.memory_space<vmem>>, %arg7: memref<8x128xf32, #tpu.memory_space<vmem>>, %arg8: memref<8x128xf32, #tpu.memory_space<vmem>>) attributes {dimension_semantics = [#tpu.dimension_semantics<parallel>, #tpu.dimension_semantics<arbitrary>], iteration_bounds = array<i64: 2, 1>, scalar_prefetch = 0 : i64, scratch_operands = 1 : i64, tpu.core_type = #tpu.core_type<tc>, window_params = [{transform_indices = @transform_0, window_bounds = array<i64: 8, 128>}, {transform_indices = @transform_1, window_bounds = array<i64: 128, 256>}, {transform_indices = @transform_2, window_bounds = array<i64: 1, 256>}, {transform_indices = @transform_3, window_bounds = array<i64: 256, 128>}, {pipeline_mode = #tpu.pipeline_mode<synchronous>, transform_indices = @transform_4, window_bounds = array<i64: 1, 128>}, {transform_indices = @transform_5, window_bounds = array<i64: 8, 128>}]} {
    %c0 = arith.constant 0 : index
    %c0_0 = arith.constant 0 : index
    %0 = vector.load %arg2[%c0, %c0_0] : memref<8x128xf32, #tpu.memory_space<vmem>>, vector<8x128xf32>
    %c0_1 = arith.constant 0 : index
    %c0_2 = arith.constant 0 : index
    %1 = vector.load %arg3[%c0_1, %c0_2] : memref<128x256xf32, #tpu.memory_space<vmem>>, vector<128x256xf32>
    %cst = arith.constant dense<0.000000e+00> : vector<8x256xf32>
    %2 = tpu.matmul %0, %1, %cst {dimension_numbers = #tpu.dot_dimension_numbers<[1], [0], [0], [1], [0, 0, 1, 1], [], []>} : vector<8x128xf32>, vector<128x256xf32>, vector<8x256xf32> -> vector<8x256xf32>
    %c0_3 = arith.constant 0 : index
    %c0_4 = arith.constant 0 : index
    %3 = vector.load %arg4[%c0_3, %c0_4] : memref<1x256xf32, #tpu.memory_space<vmem>>, vector<1x256xf32>
    %4 = vector.broadcast %3 : vector<1x256xf32> to vector<8x256xf32>
    %5 = arith.addf %2, %4 : vector<8x256xf32>
    %cst_5 = arith.constant 0.000000e+00 : f32
    %6 = vector.broadcast %cst_5 : f32 to vector<8x256xf32>
    %7 = arith.maximumf %5, %6 : vector<8x256xf32>
    %c0_6 = arith.constant 0 : index
    %c0_7 = arith.constant 0 : index
    %8 = vector.load %arg5[%c0_6, %c0_7] : memref<256x128xf32, #tpu.memory_space<vmem>>, vector<256x128xf32>
    %cst_8 = arith.constant dense<0.000000e+00> : vector<8x128xf32>
    %9 = tpu.matmul %7, %8, %cst_8 {dimension_numbers = #tpu.dot_dimension_numbers<[1], [0], [0], [1], [0, 0, 1, 1], [], []>} : vector<8x256xf32>, vector<256x128xf32>, vector<8x128xf32> -> vector<8x128xf32>
    %c0_i32 = arith.constant 0 : i32
    %10 = arith.cmpi eq, %arg1, %c0_i32 : i32
    %11 = arith.extui %10 : i1 to i32
    %c0_i32_9 = arith.constant 0 : i32
    %12 = arith.cmpi ne, %11, %c0_i32_9 : i32
    scf.if %12 {
      %c0_14 = arith.constant 0 : index
      %c0_15 = arith.constant 0 : index
      %19 = vector.load %arg8[%c0_14, %c0_15] : memref<8x128xf32, #tpu.memory_space<vmem>>, vector<8x128xf32>
      tpu.vector_store %arg8[%c0_14, %c0_15], %9 {strides = array<i32>} : memref<8x128xf32, #tpu.memory_space<vmem>>, vector<8x128xf32>,
    } else {
    }
    %c0_i32_10 = arith.constant 0 : i32
    %13 = arith.cmpi sgt, %arg1, %c0_i32_10 : i32
    %14 = arith.extui %13 : i1 to i32
    %c0_i32_11 = arith.constant 0 : i32
    %15 = arith.cmpi ne, %14, %c0_i32_11 : i32
    scf.if %15 {
      %c0_14 = arith.constant 0 : index
      %c0_15 = arith.constant 0 : index
      %19 = vector.load %arg8[%c0_14, %c0_15] : memref<8x128xf32, #tpu.memory_space<vmem>>, vector<8x128xf32>
      %20 = arith.addf %19, %9 : vector<8x128xf32>
      %c0_16 = arith.constant 0 : index
      %c0_17 = arith.constant 0 : index
      %21 = vector.load %arg8[%c0_16, %c0_17] : memref<8x128xf32, #tpu.memory_space<vmem>>, vector<8x128xf32>
      tpu.vector_store %arg8[%c0_16, %c0_17], %20 {strides = array<i32>} : memref<8x128xf32, #tpu.memory_space<vmem>>, vector<8x128xf32>,
    } else {
    }
    %c0_i32_12 = arith.constant 0 : i32
    %16 = arith.cmpi eq, %arg1, %c0_i32_12 : i32
    %17 = arith.extui %16 : i1 to i32
    %c0_i32_13 = arith.constant 0 : i32
    %18 = arith.cmpi ne, %17, %c0_i32_13 : i32
    scf.if %18 {
      %c0_14 = arith.constant 0 : index
      %c0_15 = arith.constant 0 : index
      %19 = vector.load %arg8[%c0_14, %c0_15] : memref<8x128xf32, #tpu.memory_space<vmem>>, vector<8x128xf32>
      %c0_16 = arith.constant 0 : index
      %c0_17 = arith.constant 0 : index
      %20 = vector.load %arg6[%c0_16, %c0_17] : memref<1x128xf32, #tpu.memory_space<vmem>>, vector<1x128xf32>
      %21 = vector.broadcast %20 : vector<1x128xf32> to vector<8x128xf32>
      %22 = arith.addf %19, %21 : vector<8x128xf32>
      %c0_18 = arith.constant 0 : index
      %c0_19 = arith.constant 0 : index
      %23 = vector.load %arg7[%c0_18, %c0_19] : memref<8x128xf32, #tpu.memory_space<vmem>>, vector<8x128xf32>
      tpu.vector_store %arg7[%c0_18, %c0_19], %22 {strides = array<i32>} : memref<8x128xf32, #tpu.memory_space<vmem>>, vector<8x128xf32>,
    } else {
    }
    return
  }
  func.func @transform_0(%arg0: i32, %arg1: i32) -> (i32, i32) {
    %c0_i32 = arith.constant 0 : i32
    %c0_i32_0 = arith.constant 0 : i32
    return %arg0, %c0_i32 : i32, i32
  }
  func.func @transform_1(%arg0: i32, %arg1: i32) -> (i32, i32) {
    %c0_i32 = arith.constant 0 : i32
    %c0_i32_0 = arith.constant 0 : i32
    return %c0_i32, %arg1 : i32, i32
  }
  func.func @transform_2(%arg0: i32, %arg1: i32) -> (i32, i32) {
    %c0_i32 = arith.constant 0 : i32
    %c0_i32_0 = arith.constant 0 : i32
    return %c0_i32, %arg1 : i32, i32
  }
  func.func @transform_3(%arg0: i32, %arg1: i32) -> (i32, i32) {
    %c0_i32 = arith.constant 0 : i32
    %c0_i32_0 = arith.constant 0 : i32
    return %arg1, %c0_i32 : i32, i32
  }
  func.func @transform_4(%arg0: i32, %arg1: i32) -> (i32, i32) {
    %c0_i32 = arith.constant 0 : i32
    %c0_i32_0 = arith.constant 0 : i32
    %c0_i32_1 = arith.constant 0 : i32
    return %c0_i32, %c0_i32_0 : i32, i32
  }
  func.func @transform_5(%arg0: i32, %arg1: i32) -> (i32, i32) {
    %c0_i32 = arith.constant 0 : i32
    %c0_i32_0 = arith.constant 0 : i32
    return %arg0, %c0_i32 : i32, i32
  }
}

</mosaic_0001>

<llo_original>
// kernel: tpu_custom_call.1
$region0: #{tpu_custom_call.1}
  #allocation0 [shape = 'u32[]', space=smem, size = 0x4, offset = 0x4, fixed_abs, tag = 'smem constant byte address 0x4 - core index']
  #allocation1 [shape = 'u32[144,128]{1,0:T(1,128)}', space=vmem, size = 0x12000, scoped, tag = 'internal scratch']
  #allocation2 [shape = 'f32[8,128]{1,0:T(8,128)}', space=vmem, size = 0x1000, scoped, tag = 'scratch operand']
  %s0 = inlined_call_operand.hbm [shape: f32[16,128], index: 0, kind: input, shape index: {}]
  %s1 = inlined_call_operand.hbm [shape: f32[128,256], index: 1, kind: input, shape index: {}]
  %s2 = inlined_call_operand.vmem [shape: f32[1,256], index: 2, kind: input, shape index: {}]
  %s3 = inlined_call_operand.hbm [shape: f32[256,128], index: 3, kind: input, shape index: {}]
  %s4 = inlined_call_operand.vmem [shape: f32[1,128], index: 4, kind: input, shape index: {}]
  %s5 = inlined_call_operand.hbm [shape: f32[16,128], index: 5, kind: output, shape index: {}]
  %s6 = sld [smem:[#allocation0]]
  $region77: #{tpu_custom_call.1} parent=0
    _
  %s8 = ssub.s32 1, %s6
  %s9 = scalar_select 0, %s8, %s6
  $region1: #{tpu_custom_call.1} parent=0
    #allocation3 [shape = 'u8[8192]{0}', space=vmem, size = 0x2000, scoped, tag = 'input window, operand 0']
    #allocation4 [shape = 's32[2]{0}', space=sflag, size = 0x8, scoped, tag = 'scoped memory for tpu_custom_call.1']
    #allocation5 [shape = 's32[2]{0}', space=sflag, size = 0x8, scoped, tag = 'scoped memory for tpu_custom_call.1']
    #allocation6 [shape = 'u8[131072]{0}', space=vmem, size = 0x20000, scoped, tag = 'input window, operand 1, single buffered']
    #allocation7 [shape = 's32[1]{0}', space=sflag, size = 0x4, scoped, tag = 'scoped memory for tpu_custom_call.1']
    #allocation8 [shape = 'u8[131072]{0}', space=vmem, size = 0x20000, scoped, tag = 'input window, operand 3, single buffered']
    #allocation9 [shape = 'u8[8192]{0}', space=vmem, size = 0x2000, scoped, tag = 'output window, operand 0']
    %10 = vsyncpa [#allocation4], 0
    %s11 = scalar_lea.sflag [#allocation4], 1
    %12 = vsyncpa %s11, 0
    %13 = vsyncpa [#allocation7], 0
    %14 = vsyncpa [#allocation5], 0
    %s15 = scalar_lea.sflag [#allocation5], 1
    %16 = vsyncpa %s15, 0
    loop: start=0, step=1, limit=4
    $region2: #{tpu_custom_call.1} parent=1 // loop_pre_header
      _
    $region3: #{tpu_custom_call.1} parent=1 // loop_header
      %s18 = sphi 0, %s22
      %p19 = scmp.ge.s32.totalorder %s18, 4
      %s25 = sphi 0, %s37
      %s26 = sphi 0, %s33
      %s27 = sphi 0, %s25
      %s28 = sphi 0, %s26
      %s29 = sphi 0, %s27
      %s30 = sphi 0, %s28
      %s40 = sphi 0, %s42
      %s43 = sphi 0, %s40
      %s44 = sphi 0, %s43
      %s60 = sphi 0, %s44
      %s66 = sphi 0, %s68
      %s69 = sphi 0, %s66
      %s70 = sphi 0, %s69
      %s86 = sphi 0, %s70
      %s92 = sphi 0, %s94
      %s95 = sphi 0, %s92
      %s96 = sphi 0, %s95
      %s112 = sphi 0, %s96
      %s118 = sphi 0, %s120
      %s121 = sphi 0, %s118
      %s122 = sphi 0, %s121
      %s138 = sphi 0, %s122
      %s142 = sphi 0, %s142
      %s144 = sphi 0, %s142
      %s145 = sphi 0, %s144
      %s159 = sphi 0, %s145
      %s165 = sphi 0, %s167
      %s168 = sphi 0, %s165
      %s169 = sphi 0, %s168
      %s185 = sphi 0, %s169
    $region4: #{tpu_custom_call.1} parent=1 // loop_header_branch
      %21 = sbr.rel (%p19) target = $region8
    $region5: #{tpu_custom_call.1} parent=1 // loop_body
      %s23 = ssub.s32 %s18, 1
      %s24 = ssub.s32 %s18, 2
      %s31 = sadd.s32 1, %s26
      %p32 = scmp.ge.s32.totalorder %s31, 1
      %s33 = scalar_select %p32, 0, %s31
      %s34 = sadd.s32 1, %s25
      %s35 = scalar_select %p32, %s34, %s25
      %p36 = scmp.ge.s32.totalorder %s35, 2
      %s37 = scalar_select %p36, 0, %s35
      %s38 = ssub.s32 %s25, %s37
      %p39 = scmp.eq.s32.totalorder %s38, 0
      %s41 = sadd.s32 %s40, 1
      %s42 = scalar_select %p39, %s40, %s41
      %p45 = pneg %p39
      %p46 = scmp.eq.s32.totalorder %s18, 1
      %p47 = por %p45, %p46
      %p48 = scmp.ne.s32.totalorder %s40, %s43
      %p49 = scmp.eq.s32.totalorder %s18, 0
      %p50 = por %p48, %p49
      %p51 = scmp.ne.s32.totalorder %s40, %s43
      %p52 = scmp.eq.s32.totalorder %s23, 1
      %p53 = por %p51, %p52
      %p54 = scmp.ne.s32.totalorder %s43, %s44
      %p55 = scmp.eq.s32.totalorder %s23, 0
      %p56 = por %p54, %p55
      %p57 = scmp.ne.s32.totalorder %s43, %s44
      %p58 = scmp.eq.s32.totalorder %s24, 1
      %p59 = por %p57, %p58
      %p61 = scmp.ne.s32.totalorder %s44, %s60
      %p62 = scmp.eq.s32.totalorder %s24, 0
      %p63 = por %p61, %p62
      %s64 = ssub.s32 %s26, %s33
      %p65 = scmp.eq.s32.totalorder %s64, 0
      %s67 = sadd.s32 %s66, 1
      %s68 = scalar_select %p65, %s66, %s67
      %p71 = pneg %p65
      %p72 = scmp.eq.s32.totalorder %s18, 1
      %p73 = por %p71, %p72
      %p74 = scmp.ne.s32.totalorder %s66, %s69
      %p75 = scmp.eq.s32.totalorder %s18, 0
      %p76 = por %p74, %p75
      %p77 = scmp.ne.s32.totalorder %s66, %s69
      %p78 = scmp.eq.s32.totalorder %s23, 1
      %p79 = por %p77, %p78
      %p80 = scmp.ne.s32.totalorder %s69, %s70
      %p81 = scmp.eq.s32.totalorder %s23, 0
      %p82 = por %p80, %p81
      %p83 = scmp.ne.s32.totalorder %s69, %s70
      %p84 = scmp.eq.s32.totalorder %s24, 1
      %p85 = por %p83, %p84
      %p87 = scmp.ne.s32.totalorder %s70, %s86
      %p88 = scmp.eq.s32.totalorder %s24, 0
      %p89 = por %p87, %p88
      %s90 = ssub.s32 %s26, %s33
      %p91 = scmp.eq.s32.totalorder %s90, 0
      %s93 = sadd.s32 %s92, 1
      %s94 = scalar_select %p91, %s92, %s93
      %p97 = pneg %p91
      %p98 = scmp.eq.s32.totalorder %s18, 1
      %p99 = por %p97, %p98
      %p100 = scmp.ne.s32.totalorder %s92, %s95
      %p101 = scmp.eq.s32.totalorder %s18, 0
      %p102 = por %p100, %p101
      %p103 = scmp.ne.s32.totalorder %s92, %s95
      %p104 = scmp.eq.s32.totalorder %s23, 1
      %p105 = por %p103, %p104
      %p106 = scmp.ne.s32.totalorder %s95, %s96
      %p107 = scmp.eq.s32.totalorder %s23, 0
      %p108 = por %p106, %p107
      %p109 = scmp.ne.s32.totalorder %s95, %s96
      %p110 = scmp.eq.s32.totalorder %s24, 1
      %p111 = por %p109, %p110
      %p113 = scmp.ne.s32.totalorder %s96, %s112
      %p114 = scmp.eq.s32.totalorder %s24, 0
      %p115 = por %p113, %p114
      %s116 = ssub.s32 %s26, %s33
      %p117 = scmp.eq.s32.totalorder %s116, 0
      %s119 = sadd.s32 %s118, 1
      %s120 = scalar_select %p117, %s118, %s119
      %p123 = pneg %p117
      %p124 = scmp.eq.s32.totalorder %s18, 1
      %p125 = por %p123, %p124
      %p126 = scmp.ne.s32.totalorder %s118, %s121
      %p127 = scmp.eq.s32.totalorder %s18, 0
      %p128 = por %p126, %p127
      %p129 = scmp.ne.s32.totalorder %s118, %s121
      %p130 = scmp.eq.s32.totalorder %s23, 1
      %p131 = por %p129, %p130
      %p132 = scmp.ne.s32.totalorder %s121, %s122
      %p133 = scmp.eq.s32.totalorder %s23, 0
      %p134 = por %p132, %p133
      %p135 = scmp.ne.s32.totalorder %s121, %s122
      %p136 = scmp.eq.s32.totalorder %s24, 1
      %p137 = por %p135, %p136
      %p139 = scmp.ne.s32.totalorder %s122, %s138
      %p140 = scmp.eq.s32.totalorder %s24, 0
      %p141 = por %p139, %p140
      %s143 = sadd.s32 %s142, 1
      %p146 = scmp.eq.s32.totalorder %s18, 1
      %p147 = scmp.ne.s32.totalorder %s142, %s144
      %p148 = scmp.eq.s32.totalorder %s18, 0
      %p149 = por %p147, %p148
      %p150 = scmp.ne.s32.totalorder %s142, %s144
      %p151 = scmp.eq.s32.totalorder %s23, 1
      %p152 = por %p150, %p151
      %p153 = scmp.ne.s32.totalorder %s144, %s145
      %p154 = scmp.eq.s32.totalorder %s23, 0
      %p155 = por %p153, %p154
      %p156 = scmp.ne.s32.totalorder %s144, %s145
      %p157 = scmp.eq.s32.totalorder %s24, 1
      %p158 = por %p156, %p157
      %p160 = scmp.ne.s32.totalorder %s145, %s159
      %p161 = scmp.eq.s32.totalorder %s24, 0
      %p162 = por %p160, %p161
      %s163 = ssub.s32 %s25, %s37
      %p164 = scmp.eq.s32.totalorder %s163, 0
      %s166 = sadd.s32 %s165, 1
      %s167 = scalar_select %p164, %s165, %s166
      %p170 = pneg %p164
      %p171 = scmp.eq.s32.totalorder %s18, 1
      %p172 = por %p170, %p171
      %p173 = scmp.ne.s32.totalorder %s165, %s168
      %p174 = scmp.eq.s32.totalorder %s18, 0
      %p175 = por %p173, %p174
      %p176 = scmp.ne.s32.totalorder %s165, %s168
      %p177 = scmp.eq.s32.totalorder %s23, 1
      %p178 = por %p176, %p177
      %p179 = scmp.ne.s32.totalorder %s168, %s169
      %p180 = scmp.eq.s32.totalorder %s23, 0
      %p181 = por %p179, %p180
      %p182 = scmp.ne.s32.totalorder %s168, %s169
      %p183 = scmp.eq.s32.totalorder %s24, 1
      %p184 = por %p182, %p183
      %p186 = scmp.ne.s32.totalorder %s169, %s185
      %p187 = scmp.eq.s32.totalorder %s24, 0
      %p188 = por %p186, %p187
      %p189 = scmp.le.s32.totalorder 1, %s18
      %p190 = scmp.lt.s32.totalorder %s18, 3
      %p191 = pnand %p189, %p190
      %p192 = pneg %p191
      // Predicated region
      $region9: #{tpu_custom_call.1} parent=5 // pred_check
        _
      $region10: #{tpu_custom_call.1} parent=5 // pred_check_branch
        %194 = sbr.rel (%p191) target = $region12
      $region11: #{tpu_custom_call.1} parent=5 // pred_region
        %s195 = ssub.s32 %s18, 1
        // Predicated region
        $region13: #{tpu_custom_call.1} parent=11 // pred_check
          %p196 = pneg %p82
        $region14: #{tpu_custom_call.1} parent=11 // pred_check_branch
          %198 = sbr.rel (%p196) target = $region16
        $region15: #{tpu_custom_call.1} parent=11 // pred_region
          %s199 = smul.u32 2, %s28
          %s201 = ssub.s32 4096, 4096
          %202 = vsyncadd [#allocation7], %s201
          %s203 = smul.addr %s199, 128
          %s204 = scalar_lea.hbm %s1, %s203
          %s205 = sshll.u32 [#allocation6], 4
          %s206 = int_to_ptr.vmem [resolvable:$true] %s205
          %211 = dma.hbm_to_vmem [thread:$0]  %s204, 4096, %s206, [#allocation7], 256, 256, 16
        $region16: #{tpu_custom_call.1} parent=11 // pred_fallthru
          _
        // Predicated region
        $region17: #{tpu_custom_call.1} parent=11 // pred_check
          %p212 = pneg %p108
        $region18: #{tpu_custom_call.1} parent=11 // pred_check_branch
          %214 = sbr.rel (%p212) target = $region20
        $region19: #{tpu_custom_call.1} parent=11 // pred_region
          %s215 = smul.u32 2, %s28
          %p216 = scmp.lt.s32.totalorder %s215, 1
          %s217 = scalar_select %p216, %s215, 1
          %s218 = scalar_lea.vmem %s2, %s217
          %s219 = smul.u32 2, %s28
        $region20: #{tpu_custom_call.1} parent=11 // pred_fallthru
          _
        // Predicated region
        $region21: #{tpu_custom_call.1} parent=11 // pred_check
          %p220 = pneg %p134
        $region22: #{tpu_custom_call.1} parent=11 // pred_check_branch
          %222 = sbr.rel (%p220) target = $region24
        $region23: #{tpu_custom_call.1} parent=11 // pred_region
          %s223 = smul.u32 32, %s28
          %s225 = ssub.s32 4096, 4096
          %226 = vsyncadd [#allocation7], %s225
          %s227 = smul.addr %s223, 128
          %s228 = scalar_lea.hbm %s3, %s227
          %s229 = sshll.u32 [#allocation8], 4
          %s230 = int_to_ptr.vmem [resolvable:$true] %s229
          %235 = dma.hbm_to_vmem [thread:$0]  %s228, 4096, %s230, [#allocation7], 128, 128, 8
        $region24: #{tpu_custom_call.1} parent=11 // pred_fallthru
          _
        // Predicated region
        $region25: #{tpu_custom_call.1} parent=11 // pred_check
          %p236 = pneg %p155
        $region26: #{tpu_custom_call.1} parent=11 // pred_check_branch
          %238 = sbr.rel (%p236) target = $region28
        $region27: #{tpu_custom_call.1} parent=11 // pred_region
          _
        $region28: #{tpu_custom_call.1} parent=11 // pred_fallthru
          _
      $region12: #{tpu_custom_call.1} parent=5 // pred_fallthru
        _
      %p239 = scmp.lt.s32.totalorder %s18, 2
      // Predicated region
      $region29: #{tpu_custom_call.1} parent=5 // pred_check
        %p240 = pneg %p239
      $region30: #{tpu_custom_call.1} parent=5 // pred_check_branch
        %242 = sbr.rel (%p240) target = $region32
      $region31: #{tpu_custom_call.1} parent=5 // pred_region
        // Predicated region
        $region33: #{tpu_custom_call.1} parent=31 // pred_check
          %p243 = pneg %p50
        $region34: #{tpu_custom_call.1} parent=31 // pred_check_branch
          %245 = sbr.rel (%p243) target = $region36
        $region35: #{tpu_custom_call.1} parent=31 // pred_region
          %s246 = sand.u32 %s40, 1
          %s247 = scalar_lea.sflag [#allocation4], %s246
          %s248 = sand.u32 %s40, 1
          %s249 = smul.addr %s248, 8
          %s250 = scalar_lea.vmem [#allocation3], %s249
          %s252 = ssub.s32 128, 128
          %253 = vsyncadd %s247, %s252
          %s254 = smul.addr %s25, 128
          %s255 = scalar_lea.hbm %s0, %s254
          %s257 = sshll.u32 %s250, 4
          %s258 = int_to_ptr.vmem [resolvable:$true] %s257
          %260 = dma.hbm_to_vmem [thread:$0]  %s255, 128, %s258, %s247
        $region36: #{tpu_custom_call.1} parent=31 // pred_fallthru
          _
      $region32: #{tpu_custom_call.1} parent=5 // pred_fallthru
        _
      %p261 = scmp.le.s32.totalorder 1, %s18
      %p262 = scmp.lt.s32.totalorder %s18, 3
      %p263 = pnand %p261, %p262
      %p264 = pneg %p263
      // Predicated region
      $region37: #{tpu_custom_call.1} parent=5 // pred_check
        _
      $region38: #{tpu_custom_call.1} parent=5 // pred_check_branch
        %266 = sbr.rel (%p263) target = $region40
      $region39: #{tpu_custom_call.1} parent=5 // pred_region
        %s267 = ssub.s32 %s18, 1
        %s268 = sand.u32 %s43, 1
        %s269 = scalar_lea.sflag [#allocation4], %s268
        %s270 = sand.u32 %s43, 1
        %s271 = smul.addr %s270, 8
        %s272 = scalar_lea.vmem [#allocation3], %s271
        // Predicated region
        $region41: #{tpu_custom_call.1} parent=39 // pred_check
          %p273 = pneg %p56
        $region42: #{tpu_custom_call.1} parent=39 // pred_check_branch
          %275 = sbr.rel (%p273) target = $region44
        $region43: #{tpu_custom_call.1} parent=39 // pred_region
          %276 = dma.done %s269, 128
        $region44: #{tpu_custom_call.1} parent=39 // pred_fallthru
          _
        // Predicated region
        $region45: #{tpu_custom_call.1} parent=39 // pred_check
          %p277 = pneg %p82
        $region46: #{tpu_custom_call.1} parent=39 // pred_check_branch
          %279 = sbr.rel (%p277) target = $region48
        $region47: #{tpu_custom_call.1} parent=39 // pred_region
          %280 = dma.done [#allocation7], 4096
        $region48: #{tpu_custom_call.1} parent=39 // pred_fallthru
          _
        // Predicated region
        $region49: #{tpu_custom_call.1} parent=39 // pred_check
          %p281 = pneg %p134
        $region50: #{tpu_custom_call.1} parent=39 // pred_check_branch
          %283 = sbr.rel (%p281) target = $region52
        $region51: #{tpu_custom_call.1} parent=39 // pred_region
          %284 = dma.done [#allocation7], 4096
        $region52: #{tpu_custom_call.1} parent=39 // pred_fallthru
          _
        %s285 = sand.u32 %s43, 1
        %s286 = scalar_lea.sflag [#allocation4], %s285
        %s287 = sand.u32 %s43, 1
        %s288 = smul.addr %s287, 8
        %s289 = scalar_lea.vmem [#allocation3], %s288
        %p290 = pneg %p56
        %p291 = pneg %p53
        %p292 = pneg %p82
        %p293 = pneg %p79
        %s294 = smul.u32 2, %s28
        %p295 = scmp.lt.s32.totalorder %s294, 1
        %s296 = scalar_select %p295, %s294, 1
        %s297 = scalar_lea.vmem %s2, %s296
        %p298 = pneg %p108
        %p299 = pneg %p105
        %p300 = pneg %p134
        %p301 = pneg %p131
        %p302 = pneg %p155
        %p303 = pneg %p152
        %p304 = pneg %p181
        %p305 = pneg %p178
        %s306 = sand.u32 %s168, 1
        %s307 = scalar_lea.sflag [#allocation5], %s306
        %s308 = sand.u32 %s168, 1
        %s309 = smul.addr %s308, 8
        %s310 = scalar_lea.vmem [#allocation9], %s309
        %s311 = smul.u32 2, %s28
        %s312 = smul.u32 2, %s28
        %p313 = scmp.lt.s32.totalorder %s312, 1
        %s314 = scalar_select %p313, %s312, 1
        %s315 = scalar_lea.vmem %s2, %s314
        %s316 = smul.u32 2, %s28
        %s317 = smul.u32 32, %s28
        %v318 = vld [vmem:[%s272] sm:$0xff]
        %v319 = vld [vmem:[#allocation6] sm:$0xff]
        %v320 = vld [vmem:[#allocation6 + $0x8] sm:$0xff]
        %v321 = vld [vmem:[#allocation6 + $0x10] sm:$0xff]
        %v322 = vld [vmem:[#allocation6 + $0x18] sm:$0xff]
        %v323 = vld [vmem:[#allocation6 + $0x20] sm:$0xff]
        %v324 = vld [vmem:[#allocation6 + $0x28] sm:$0xff]
        %v325 = vld [vmem:[#allocation6 + $0x30] sm:$0xff]
        %v326 = vld [vmem:[#allocation6 + $0x38] sm:$0xff]
        %v327 = vld [vmem:[#allocation6 + $0x40] sm:$0xff]
        %v328 = vld [vmem:[#allocation6 + $0x48] sm:$0xff]
        %v329 = vld [vmem:[#allocation6 + $0x50] sm:$0xff]
        %v330 = vld [vmem:[#allocation6 + $0x58] sm:$0xff]
        %v331 = vld [vmem:[#allocation6 + $0x60] sm:$0xff]
        %v332 = vld [vmem:[#allocation6 + $0x68] sm:$0xff]
        %v333 = vld [vmem:[#allocation6 + $0x70] sm:$0xff]
        %v334 = vld [vmem:[#allocation6 + $0x78] sm:$0xff]
        %v335 = vld [vmem:[#allocation6 + $0x80] sm:$0xff]
        %v336 = vld [vmem:[#allocation6 + $0x88] sm:$0xff]
        %v337 = vld [vmem:[#allocation6 + $0x90] sm:$0xff]
        %v338 = vld [vmem:[#allocation6 + $0x98] sm:$0xff]
        %v339 = vld [vmem:[#allocation6 + $0xa0] sm:$0xff]
        %v340 = vld [vmem:[#allocation6 + $0xa8] sm:$0xff]
        %v341 = vld [vmem:[#allocation6 + $0xb0] sm:$0xff]
        %v342 = vld [vmem:[#allocation6 + $0xb8] sm:$0xff]
        %v343 = vld [vmem:[#allocation6 + $0xc0] sm:$0xff]
        %v344 = vld [vmem:[#allocation6 + $0xc8] sm:$0xff]
        %v345 = vld [vmem:[#allocation6 + $0xd0] sm:$0xff]
        %v346 = vld [vmem:[#allocation6 + $0xd8] sm:$0xff]
        %v347 = vld [vmem:[#allocation6 + $0xe0] sm:$0xff]
        %v348 = vld [vmem:[#allocation6 + $0xe8] sm:$0xff]
        %v349 = vld [vmem:[#allocation6 + $0xf0] sm:$0xff]
        %v350 = vld [vmem:[#allocation6 + $0xf8] sm:$0xff]
        %v351 = vld [vmem:[%s315] sm:$0x3]
        %v353 = vlaneseq
        %v354 = vshrl.u32 %v353, 7
        %v355 = vsub.s32 0, %v354
        %v356 = vrot.slane %v351, %v355
        %v357 = vlaneseq
        %v358 = vshrl.u32 %v357, 7
        %v359 = vsub.s32 1, %v358
        %v360 = vrot.slane %v351, %v359
        %363 = vmatprep.subr.mxu0 %v320
        %364 = vmatpush1.msra.mxu0 %v319
        %365 = vmatprep.subr.mxu0 %v322
        %366 = vmatpush1.msra.mxu0 %v321
        %367 = vmatprep.subr.mxu0 %v324
        %368 = vmatpush1.msra.mxu0 %v323
        %369 = vmatprep.subr.mxu0 %v326
        %370 = vmatpush1.msra.mxu0 %v325
        %371 = vmatprep.subr.mxu0 %v328
        %372 = vmatpush1.msra.mxu0 %v327
        %373 = vmatprep.subr.mxu0 %v330
        %374 = vmatpush1.msra.mxu0 %v329
        %375 = vmatprep.subr.mxu0 %v332
        %376 = vmatpush1.msra.mxu0 %v331
        %377 = vmatprep.subr.mxu0 %v334
        %378 = vmatpush1.msra.mxu0 %v333
        %379 = vmatprep.subr.mxu0 %v336
        %380 = vmatpush1.msra.mxu0 %v335
        %381 = vmatprep.subr.mxu0 %v338
        %382 = vmatpush1.msra.mxu0 %v337
        %383 = vmatprep.subr.mxu0 %v340
        %384 = vmatpush1.msra.mxu0 %v339
        %385 = vmatprep.subr.mxu0 %v342
        %386 = vmatpush1.msra.mxu0 %v341
        %387 = vmatprep.subr.mxu0 %v344
        %388 = vmatpush1.msra.mxu0 %v343
        %389 = vmatprep.subr.mxu0 %v346
        %390 = vmatpush1.msra.mxu0 %v345
        %391 = vmatprep.subr.mxu0 %v348
        %392 = vmatpush1.msra.mxu0 %v347
        %393 = vmatprep.subr.mxu0 %v350
        %394 = vmatpush1.msra.mxu0 %v349
        %395 = vmatprep.subr.mxu0 0.0
        %396 = vmatpush1.msra.mxu0 0.0
        %397 = vmatprep.subr.mxu0 0.0
        %398 = vmatpush1.msra.mxu0 0.0
        %399 = vmatprep.subr.mxu0 0.0
        %400 = vmatpush1.msra.mxu0 0.0
        %401 = vmatprep.subr.mxu0 0.0
        %402 = vmatpush1.msra.mxu0 0.0
        %403 = vmatprep.subr.mxu0 0.0
        %404 = vmatpush1.msra.mxu0 0.0
        %405 = vmatprep.subr.mxu0 0.0
        %406 = vmatpush1.msra.mxu0 0.0
        %407 = vmatprep.subr.mxu0 0.0
        %408 = vmatpush1.msra.mxu0 0.0
        %409 = vmatprep.subr.mxu0 0.0
        %410 = vmatpush1.msra.mxu0 0.0
        %411 = vmatprep.subr.mxu0 0.0
        %412 = vmatpush1.msra.mxu0 0.0
        %413 = vmatprep.subr.mxu0 0.0
        %414 = vmatpush1.msra.mxu0 0.0
        %415 = vmatprep.subr.mxu0 0.0
        %416 = vmatpush1.msra.mxu0 0.0
        %417 = vmatprep.subr.mxu0 0.0
        %418 = vmatpush1.msra.mxu0 0.0
        %419 = vmatprep.subr.mxu0 0.0
        %420 = vmatpush1.msra.mxu0 0.0
        %421 = vmatprep.subr.mxu0 0.0
        %422 = vmatpush1.msra.mxu0 0.0
        %423 = vmatprep.subr.mxu0 0.0
        %424 = vmatpush1.msra.mxu0 0.0
        %425 = vmatprep.subr.mxu0 0.0
        %426 = vmatpush1.msra.mxu0 0.0
        %427 = vmatprep.mubr.f32.mxu0 0.0
        %428 = vmatmul.mubr.f32.gmra.mrb[0].mxu0 %v318
        %v429 = vpop.f32.mrb[0].mxu0
        %v430 = vadd.f32 %v356, %v429
        %v431 = vpop.f32.mrb[0].mxu0
        %v432 = vadd.f32 %v360, %v431
        %433 = vdwg.mxu0
        %v434 = vmax.f32 %v430, 0.0
        %v435 = vmax.f32 %v432, 0.0
        %v436 = vld [vmem:[#allocation8] sm:$0xff]
        %v437 = vld [vmem:[#allocation8 + $0x8] sm:$0xff]
        %v438 = vld [vmem:[#allocation8 + $0x10] sm:$0xff]
        %v439 = vld [vmem:[#allocation8 + $0x18] sm:$0xff]
        %v440 = vld [vmem:[#allocation8 + $0x20] sm:$0xff]
        %v441 = vld [vmem:[#allocation8 + $0x28] sm:$0xff]
        %v442 = vld [vmem:[#allocation8 + $0x30] sm:$0xff]
        %v443 = vld [vmem:[#allocation8 + $0x38] sm:$0xff]
        %v444 = vld [vmem:[#allocation8 + $0x40] sm:$0xff]
        %v445 = vld [vmem:[#allocation8 + $0x48] sm:$0xff]
        %v446 = vld [vmem:[#allocation8 + $0x50] sm:$0xff]
        %v447 = vld [vmem:[#allocation8 + $0x58] sm:$0xff]
        %v448 = vld [vmem:[#allocation8 + $0x60] sm:$0xff]
        %v449 = vld [vmem:[#allocation8 + $0x68] sm:$0xff]
        %v450 = vld [vmem:[#allocation8 + $0x70] sm:$0xff]
        %v451 = vld [vmem:[#allocation8 + $0x78] sm:$0xff]
        %v452 = vld [vmem:[#allocation8 + $0x80] sm:$0xff]
        %v453 = vld [vmem:[#allocation8 + $0x88] sm:$0xff]
        %v454 = vld [vmem:[#allocation8 + $0x90] sm:$0xff]
        %v455 = vld [vmem:[#allocation8 + $0x98] sm:$0xff]
        %v456 = vld [vmem:[#allocation8 + $0xa0] sm:$0xff]
        %v457 = vld [vmem:[#allocation8 + $0xa8] sm:$0xff]
        %v458 = vld [vmem:[#allocation8 + $0xb0] sm:$0xff]
        %v459 = vld [vmem:[#allocation8 + $0xb8] sm:$0xff]
        %v460 = vld [vmem:[#allocation8 + $0xc0] sm:$0xff]
        %v461 = vld [vmem:[#allocation8 + $0xc8] sm:$0xff]
        %v462 = vld [vmem:[#allocation8 + $0xd0] sm:$0xff]
        %v463 = vld [vmem:[#allocation8 + $0xd8] sm:$0xff]
        %v464 = vld [vmem:[#allocation8 + $0xe0] sm:$0xff]
        %v465 = vld [vmem:[#allocation8 + $0xe8] sm:$0xff]
        %v466 = vld [vmem:[#allocation8 + $0xf0] sm:$0xff]
        %v467 = vld [vmem:[#allocation8 + $0xf8] sm:$0xff]
        %468 = vmatprep.subr.mxu0 0.0
        %469 = vmatpush1.msra.mxu0 %v436
        %470 = vmatprep.subr.mxu0 0.0
        %471 = vmatpush1.msra.mxu0 %v437
        %472 = vmatprep.subr.mxu0 0.0
        %473 = vmatpush1.msra.mxu0 %v438
        %474 = vmatprep.subr.mxu0 0.0
        %475 = vmatpush1.msra.mxu0 %v439
        %476 = vmatprep.subr.mxu0 0.0
        %477 = vmatpush1.msra.mxu0 %v440
        %478 = vmatprep.subr.mxu0 0.0
        %479 = vmatpush1.msra.mxu0 %v441
        %480 = vmatprep.subr.mxu0 0.0
        %481 = vmatpush1.msra.mxu0 %v442
        %482 = vmatprep.subr.mxu0 0.0
        %483 = vmatpush1.msra.mxu0 %v443
        %484 = vmatprep.subr.mxu0 0.0
        %485 = vmatpush1.msra.mxu0 %v444
        %486 = vmatprep.subr.mxu0 0.0
        %487 = vmatpush1.msra.mxu0 %v445
        %488 = vmatprep.subr.mxu0 0.0
        %489 = vmatpush1.msra.mxu0 %v446
        %490 = vmatprep.subr.mxu0 0.0
        %491 = vmatpush1.msra.mxu0 %v447
        %492 = vmatprep.subr.mxu0 0.0
        %493 = vmatpush1.msra.mxu0 %v448
        %494 = vmatprep.subr.mxu0 0.0
        %495 = vmatpush1.msra.mxu0 %v449
        %496 = vmatprep.subr.mxu0 0.0
        %497 = vmatpush1.msra.mxu0 %v450
        %498 = vmatprep.subr.mxu0 0.0
        %499 = vmatpush1.msra.mxu0 %v451
        %500 = vmatprep.subr.mxu0 0.0
        %501 = vmatpush1.msra.mxu0 %v452
        %502 = vmatprep.subr.mxu0 0.0
        %503 = vmatpush1.msra.mxu0 %v453
        %504 = vmatprep.subr.mxu0 0.0
        %505 = vmatpush1.msra.mxu0 %v454
        %506 = vmatprep.subr.mxu0 0.0
        %507 = vmatpush1.msra.mxu0 %v455
        %508 = vmatprep.subr.mxu0 0.0
        %509 = vmatpush1.msra.mxu0 %v456
        %510 = vmatprep.subr.mxu0 0.0
        %511 = vmatpush1.msra.mxu0 %v457
        %512 = vmatprep.subr.mxu0 0.0
        %513 = vmatpush1.msra.mxu0 %v458
        %514 = vmatprep.subr.mxu0 0.0
        %515 = vmatpush1.msra.mxu0 %v459
        %516 = vmatprep.subr.mxu0 0.0
        %517 = vmatpush1.msra.mxu0 %v460
        %518 = vmatprep.subr.mxu0 0.0
        %519 = vmatpush1.msra.mxu0 %v461
        %520 = vmatprep.subr.mxu0 0.0
        %521 = vmatpush1.msra.mxu0 %v462
        %522 = vmatprep.subr.mxu0 0.0
        %523 = vmatpush1.msra.mxu0 %v463
        %524 = vmatprep.subr.mxu0 0.0
        %525 = vmatpush1.msra.mxu0 %v464
        %526 = vmatprep.subr.mxu0 0.0
        %527 = vmatpush1.msra.mxu0 %v465
        %528 = vmatprep.subr.mxu0 0.0
        %529 = vmatpush1.msra.mxu0 %v466
        %530 = vmatprep.subr.mxu0 0.0
        %531 = vmatpush1.msra.mxu0 %v467
        %532 = vmatprep.mubr.f32.mxu0 %v435
        %533 = vmatmul.mubr.f32.gmra.mrb[0].mxu0 %v434
        %v534 = vpop.f32.mrb[0].mxu0
        %v535 = vadd.f32 0.0, %v534
        %v536 = vpop.f32.mrb[0].mxu0
        %537 = vdwg.mxu0
        %p538 = scmp.eq.s32.totalorder %s28, 0
        // Predicated region
        $region53: #{tpu_custom_call.1} parent=39 // pred_check
          %p539 = pneg %p538
        $region54: #{tpu_custom_call.1} parent=39 // pred_check_branch
          %541 = sbr.rel (%p539) target = $region56
        $region55: #{tpu_custom_call.1} parent=39 // pred_region
          %542 = vst [vmem:[#allocation2] sm:$0xff] %v535
        $region56: #{tpu_custom_call.1} parent=39 // pred_fallthru
          _
        %p543 = scmp.gt.s32.totalorder %s28, 0
        // Predicated region
        $region57: #{tpu_custom_call.1} parent=39 // pred_check
          %p544 = pneg %p543
        $region58: #{tpu_custom_call.1} parent=39 // pred_check_branch
          %546 = sbr.rel (%p544) target = $region60
        $region59: #{tpu_custom_call.1} parent=39 // pred_region
          %v547 = vld [vmem:[#allocation2] sm:$0xff]
          %v548 = vadd.f32 %v547, %v535
          %549 = vst [vmem:[#allocation2] sm:$0xff] %v548
        $region60: #{tpu_custom_call.1} parent=39 // pred_fallthru
          _
        // Predicated region
        $region61: #{tpu_custom_call.1} parent=39 // pred_check
          %p550 = pneg %p538
        $region62: #{tpu_custom_call.1} parent=39 // pred_check_branch
          %552 = sbr.rel (%p550) target = $region64
        $region63: #{tpu_custom_call.1} parent=39 // pred_region
          %v553 = vld [vmem:[#allocation2] sm:$0xff]
          %v554 = vld [vmem:[%s4] sm:$0x1]
          %v556 = vlaneseq
          %v557 = vshrl.u32 %v556, 7
          %v558 = vsub.s32 0, %v557
          %v559 = vrot.slane %v554, %v558
          %v561 = vadd.f32 %v553, %v559
          %562 = vst [vmem:[%s310] sm:$0xff] %v561
        $region64: #{tpu_custom_call.1} parent=39 // pred_fallthru
          _
        %s563 = sand.u32 %s168, 1
        %s564 = scalar_lea.sflag [#allocation5], %s563
        %s565 = sand.u32 %s168, 1
        %s566 = smul.addr %s565, 8
        %s567 = scalar_lea.vmem [#allocation9], %s566
        // Predicated region
        $region65: #{tpu_custom_call.1} parent=39 // pred_check
          %p568 = pneg %p178
        $region66: #{tpu_custom_call.1} parent=39 // pred_check_branch
          %570 = sbr.rel (%p568) target = $region68
        $region67: #{tpu_custom_call.1} parent=39 // pred_region
          %s572 = ssub.s32 128, 128
          %573 = vsyncadd %s564, %s572
          %s574 = smul.addr %s27, 128
          %s575 = scalar_lea.hbm %s5, %s574
          %s577 = sshll.u32 %s567, 4
          %s578 = int_to_ptr.vmem [resolvable:$true] %s577
          %580 = dma.vmem_to_hbm [thread:$0]  %s578, 128, %s575, %s564
        $region68: #{tpu_custom_call.1} parent=39 // pred_fallthru
          _
      $region40: #{tpu_custom_call.1} parent=5 // pred_fallthru
        _
      %p581 = scmp.le.s32.totalorder 2, %s18
      // Predicated region
      $region69: #{tpu_custom_call.1} parent=5 // pred_check
        %p582 = pneg %p581
      $region70: #{tpu_custom_call.1} parent=5 // pred_check_branch
        %584 = sbr.rel (%p582) target = $region72
      $region71: #{tpu_custom_call.1} parent=5 // pred_region
        %s585 = ssub.s32 %s18, 2
        // Predicated region
        $region73: #{tpu_custom_call.1} parent=71 // pred_check
          %p586 = pneg %p184
        $region74: #{tpu_custom_call.1} parent=71 // pred_check_branch
          %588 = sbr.rel (%p586) target = $region76
        $region75: #{tpu_custom_call.1} parent=71 // pred_region
          %s589 = sand.u32 %s169, 1
          %s590 = scalar_lea.sflag [#allocation5], %s589
          %s591 = sand.u32 %s169, 1
          %s592 = smul.addr %s591, 8
          %s593 = scalar_lea.vmem [#allocation9], %s592
          %594 = dma.done %s590, 128
        $region76: #{tpu_custom_call.1} parent=71 // pred_fallthru
          _
      $region72: #{tpu_custom_call.1} parent=5 // pred_fallthru
        _
    $region6: #{tpu_custom_call.1} parent=1 // loop_footer
      %s22 = sadd.s32 1, %s18
    $region7: #{tpu_custom_call.1} parent=1 // loop_footer_branch
      %17 = sbr.rel target = $region3
    $region8: #{tpu_custom_call.1} parent=1 // loop_exit
      _
    %595 = vsyncpa [#allocation4], 1
    %s596 = scalar_lea.sflag [#allocation4], 1
    %597 = vsyncpa %s596, 1
    %598 = vsyncpa [#allocation7], 1
    %599 = vsyncpa [#allocation5], 1
    %s600 = scalar_lea.sflag [#allocation5], 1
    %601 = vsyncpa %s600, 1

</llo_original>
